<compile_context>
chip_gen: v6e
topology: v6e:2x2x1
jax: 0.10.0
libtpu: 0.0.40
codegen_flags: <defaults>
</compile_context>

<pallas_src>
import jax
import jax.numpy as jnp
from jax.experimental import pallas as pl
from jax.experimental.pallas import tpu as pltpu


def simple_gate_kernel(x1_ref, x2_ref, o_ref):
    # x1_ref, x2_ref, o_ref blocks: (C//2, TILE_HW) — pure elementwise multiply.
    o_ref[...] = x1_ref[...] * x2_ref[...]


def _pick_tile_hw(hw, c_half, itemsize, vmem_budget_bytes=12 << 20):
    """Largest multiple-of-128 tile dividing hw whose (2 in + 1 out) x 2-buffer
    footprint fits a conservative VMEM budget (safe on all generations)."""
    if hw % 128 != 0:
        # Fall back to the full extent (allowed by BlockSpec).
        return hw
    per_lane_bytes = 3 * c_half * itemsize * 2  # 3 buffers, double-buffered
    max_lanes = max(128, (vmem_budget_bytes // per_lane_bytes) // 128 * 128)
    tile = min(hw, max_lanes)
    while hw % tile != 0:  # terminates at 128, which always divides hw here
        tile -= 128
    return tile


def simple_gate(x, tile_hw=None):
    """x: (N, C, H, W) with C even -> (N, C//2, H, W), matching
    torch: x1, x2 = x.chunk(2, dim=1); return x1 * x2."""
    n, c, h, w = x.shape
    assert c % 2 == 0, "SimpleGate requires an even number of channels"
    c_half = c // 2
    hw = h * w

    # Free, contiguous view: splits channels into two aligned halves.
    x_split = x.reshape(n, 2, c_half, hw)

    if tile_hw is None:
        tile_hw = _pick_tile_hw(hw, c_half, x.dtype.itemsize)
    grid = (n, pl.cdiv(hw, tile_hw))

    def half_spec(sel):
        # Squeeze batch and half-select dims; kernel sees (c_half, tile_hw).
        return pl.BlockSpec(
            (None, None, c_half, tile_hw),
            lambda i, j, s=sel: (i, s, 0, j),
        )

    out_flat = pl.pallas_call(
        simple_gate_kernel,
        out_shape=jax.ShapeDtypeStruct((n, c_half, hw), x.dtype),
        grid=grid,
        in_specs=[half_spec(0), half_spec(1)],
        out_specs=pl.BlockSpec((None, c_half, tile_hw), lambda i, j: (i, 0, j)),
        compiler_params=pltpu.CompilerParams(
            dimension_semantics=("parallel", "parallel"),
        ),
    )(x_split, x_split)

    return out_flat.reshape(n, c_half, h, w)


if __name__ == "__main__":
    key = jax.random.PRNGKey(0)
    # NCHW, channels must be even so chunk(2, dim=1) splits evenly.
    x = jax.random.normal(key, (2, 8, 16, 16), dtype=jnp.float32)

    out = simple_gate(x)
    out = jax.block_until_ready(out)

    # Reference check (plain JAX) for the same semantics.
    c_half = x.shape[1] // 2
    ref = x[:, :c_half] * x[:, c_half:]
    assert out.shape == ref.shape
    assert jnp.allclose(out, ref, atol=1e-6, rtol=1e-6)

    print("KERNEL_OK")
</pallas_src>

<mosaic_0001>
module attributes {stable_mosaic.version = 11 : i64} {
  func.func @simple_gate_kernel(%arg0: i32, %arg1: i32, %arg2: memref<1x1x4x256xf32, #tpu.memory_space<vmem>>, %arg3: memref<1x1x4x256xf32, #tpu.memory_space<vmem>>, %arg4: memref<1x4x256xf32, #tpu.memory_space<vmem>>) attributes {dimension_semantics = [#tpu.dimension_semantics<parallel>, #tpu.dimension_semantics<parallel>], iteration_bounds = array<i64: 2, 1>, scalar_prefetch = 0 : i64, scratch_operands = 0 : i64, tpu.core_type = #tpu.core_type<tc>, window_params = [{transform_indices = @transform_0, window_bounds = array<i64: 1, 1, 4, 256>}, {transform_indices = @transform_1, window_bounds = array<i64: 1, 1, 4, 256>}, {transform_indices = @transform_2, window_bounds = array<i64: 1, 4, 256>}]} {
    %c0 = arith.constant 0 : index
    %c0_0 = arith.constant 0 : index
    %c0_1 = arith.constant 0 : index
    %c0_2 = arith.constant 0 : index
    %0 = vector.load %arg2[%c0, %c0_0, %c0_1, %c0_2] : memref<1x1x4x256xf32, #tpu.memory_space<vmem>>, vector<1x1x4x256xf32>
    %1 = vector.shape_cast %0 : vector<1x1x4x256xf32> to vector<4x256xf32>
    %c0_3 = arith.constant 0 : index
    %c0_4 = arith.constant 0 : index
    %c0_5 = arith.constant 0 : index
    %c0_6 = arith.constant 0 : index
    %2 = vector.load %arg3[%c0_3, %c0_4, %c0_5, %c0_6] : memref<1x1x4x256xf32, #tpu.memory_space<vmem>>, vector<1x1x4x256xf32>
    %3 = vector.shape_cast %2 : vector<1x1x4x256xf32> to vector<4x256xf32>
    %4 = arith.mulf %1, %3 : vector<4x256xf32>
    %c0_7 = arith.constant 0 : index
    %c0_8 = arith.constant 0 : index
    %c0_9 = arith.constant 0 : index
    %5 = vector.load %arg4[%c0_7, %c0_8, %c0_9] : memref<1x4x256xf32, #tpu.memory_space<vmem>>, vector<1x4x256xf32>
    %6 = vector.shape_cast %5 : vector<1x4x256xf32> to vector<4x256xf32>
    %7 = vector.shape_cast %4 : vector<4x256xf32> to vector<1x4x256xf32>
    tpu.vector_store %arg4[%c0_7, %c0_8, %c0_9], %7 {strides = array<i32>} : memref<1x4x256xf32, #tpu.memory_space<vmem>>, vector<1x4x256xf32>,
    return
  }
  func.func @transform_0(%arg0: i32, %arg1: i32) -> (i32, i32, i32, i32) {
    %c0_i32 = arith.constant 0 : i32
    %c0_i32_0 = arith.constant 0 : i32
    %c0_i32_1 = arith.constant 0 : i32
    return %arg0, %c0_i32, %c0_i32_0, %arg1 : i32, i32, i32, i32
  }
  func.func @transform_1(%arg0: i32, %arg1: i32) -> (i32, i32, i32, i32) {
    %c1_i32 = arith.constant 1 : i32
    %c0_i32 = arith.constant 0 : i32
    %c0_i32_0 = arith.constant 0 : i32
    return %arg0, %c1_i32, %c0_i32, %arg1 : i32, i32, i32, i32
  }
  func.func @transform_2(%arg0: i32, %arg1: i32) -> (i32, i32, i32) {
    %c0_i32 = arith.constant 0 : i32
    %c0_i32_0 = arith.constant 0 : i32
    return %arg0, %c0_i32, %arg1 : i32, i32, i32
  }
}

</mosaic_0001>

<llo_original>
// kernel: tpu_custom_call.1
$region0: #{tpu_custom_call.1}
  #allocation0 [shape = 'u32[]', space=smem, size = 0x4, offset = 0x4, fixed_abs, tag = 'smem constant byte address 0x4 - core index']
  #allocation1 [shape = 'u32[144,128]{1,0:T(1,128)}', space=vmem, size = 0x12000, scoped, tag = 'internal scratch']
  %s0 = inlined_call_operand.hbm [shape: f32[2,2,4,256], index: 0, kind: input, shape index: {}]
  %s1 = inlined_call_operand.hbm [shape: f32[2,2,4,256], index: 1, kind: input, shape index: {}]
  %s2 = inlined_call_operand.hbm [shape: f32[2,4,256], index: 2, kind: output, shape index: {}]
  %s3 = sld [smem:[#allocation0]]
  $region49: #{tpu_custom_call.1} parent=0
    _
  %s5 = ssub.s32 1, %s3
  %s6 = scalar_select 0, %s5, %s3
  $region1: #{tpu_custom_call.1} parent=0
    #allocation2 [shape = 'u8[8192]{0}', space=vmem, size = 0x2000, scoped, tag = 'input window, operand 0']
    #allocation3 [shape = 's32[2]{0}', space=sflag, size = 0x8, scoped, tag = 'scoped memory for tpu_custom_call.1']
    #allocation4 [shape = 's32[2]{0}', space=sflag, size = 0x8, scoped, tag = 'scoped memory for tpu_custom_call.1']
    #allocation5 [shape = 'u8[8192]{0}', space=vmem, size = 0x2000, scoped, tag = 'input window, operand 1']
    #allocation6 [shape = 's32[2]{0}', space=sflag, size = 0x8, scoped, tag = 'scoped memory for tpu_custom_call.1']
    #allocation7 [shape = 'u8[8192]{0}', space=vmem, size = 0x2000, scoped, tag = 'output window, operand 0']
    %7 = vsyncpa [#allocation3], 0
    %s8 = scalar_lea.sflag [#allocation3], 1
    %9 = vsyncpa %s8, 0
    %10 = vsyncpa [#allocation6], 0
    %s11 = scalar_lea.sflag [#allocation6], 1
    %12 = vsyncpa %s11, 0
    %13 = vsyncpa [#allocation4], 0
    %s14 = scalar_lea.sflag [#allocation4], 1
    %15 = vsyncpa %s14, 0
    loop: start=0, step=1, limit=4
    $region2: #{tpu_custom_call.1} parent=1 // loop_pre_header
      _
    $region3: #{tpu_custom_call.1} parent=1 // loop_header
      %s17 = sphi 0, %s21
      %p18 = scmp.ge.s32.totalorder %s17, 4
      %s24 = sphi 0, %s36
      %s25 = sphi 0, %s32
      %s26 = sphi 0, %s24
      %s27 = sphi 0, %s25
      %s28 = sphi 0, %s26
      %s29 = sphi 0, %s27
      %s41 = sphi 0, %s43
      %s44 = sphi 0, %s41
      %s45 = sphi 0, %s44
      %s61 = sphi 0, %s45
      %s69 = sphi 0, %s71
      %s72 = sphi 0, %s69
      %s73 = sphi 0, %s72
      %s89 = sphi 0, %s73
      %s97 = sphi 0, %s99
      %s100 = sphi 0, %s97
      %s101 = sphi 0, %s100
      %s117 = sphi 0, %s101
    $region4: #{tpu_custom_call.1} parent=1 // loop_header_branch
      %20 = sbr.rel (%p18) target = $region8
    $region5: #{tpu_custom_call.1} parent=1 // loop_body
      %s22 = ssub.s32 %s17, 1
      %s23 = ssub.s32 %s17, 2
      %s30 = sadd.s32 1, %s25
      %p31 = scmp.ge.s32.totalorder %s30, 1
      %s32 = scalar_select %p31, 0, %s30
      %s33 = sadd.s32 1, %s24
      %s34 = scalar_select %p31, %s33, %s24
      %p35 = scmp.ge.s32.totalorder %s34, 2
      %s36 = scalar_select %p35, 0, %s34
      %s37 = ssub.s32 %s24, %s36
      %s38 = ssub.s32 %s25, %s32
      %s39 = sor.u32 %s37, %s38
      %p40 = scmp.eq.s32.totalorder %s39, 0
      %s42 = sadd.s32 %s41, 1
      %s43 = scalar_select %p40, %s41, %s42
      %p46 = pneg %p40
      %p47 = scmp.eq.s32.totalorder %s17, 1
      %p48 = por %p46, %p47
      %p49 = scmp.ne.s32.totalorder %s41, %s44
      %p50 = scmp.eq.s32.totalorder %s17, 0
      %p51 = por %p49, %p50
      %p52 = scmp.ne.s32.totalorder %s41, %s44
      %p53 = scmp.eq.s32.totalorder %s22, 1
      %p54 = por %p52, %p53
      %p55 = scmp.ne.s32.totalorder %s44, %s45
      %p56 = scmp.eq.s32.totalorder %s22, 0
      %p57 = por %p55, %p56
      %p58 = scmp.ne.s32.totalorder %s44, %s45
      %p59 = scmp.eq.s32.totalorder %s23, 1
      %p60 = por %p58, %p59
      %p62 = scmp.ne.s32.totalorder %s45, %s61
      %p63 = scmp.eq.s32.totalorder %s23, 0
      %p64 = por %p62, %p63
      %s65 = ssub.s32 %s24, %s36
      %s66 = ssub.s32 %s25, %s32
      %s67 = sor.u32 %s65, %s66
      %p68 = scmp.eq.s32.totalorder %s67, 0
      %s70 = sadd.s32 %s69, 1
      %s71 = scalar_select %p68, %s69, %s70
      %p74 = pneg %p68
      %p75 = scmp.eq.s32.totalorder %s17, 1
      %p76 = por %p74, %p75
      %p77 = scmp.ne.s32.totalorder %s69, %s72
      %p78 = scmp.eq.s32.totalorder %s17, 0
      %p79 = por %p77, %p78
      %p80 = scmp.ne.s32.totalorder %s69, %s72
      %p81 = scmp.eq.s32.totalorder %s22, 1
      %p82 = por %p80, %p81
      %p83 = scmp.ne.s32.totalorder %s72, %s73
      %p84 = scmp.eq.s32.totalorder %s22, 0
      %p85 = por %p83, %p84
      %p86 = scmp.ne.s32.totalorder %s72, %s73
      %p87 = scmp.eq.s32.totalorder %s23, 1
      %p88 = por %p86, %p87
      %p90 = scmp.ne.s32.totalorder %s73, %s89
      %p91 = scmp.eq.s32.totalorder %s23, 0
      %p92 = por %p90, %p91
      %s93 = ssub.s32 %s24, %s36
      %s94 = ssub.s32 %s25, %s32
      %s95 = sor.u32 %s93, %s94
      %p96 = scmp.eq.s32.totalorder %s95, 0
      %s98 = sadd.s32 %s97, 1
      %s99 = scalar_select %p96, %s97, %s98
      %p102 = pneg %p96
      %p103 = scmp.eq.s32.totalorder %s17, 1
      %p104 = por %p102, %p103
      %p105 = scmp.ne.s32.totalorder %s97, %s100
      %p106 = scmp.eq.s32.totalorder %s17, 0
      %p107 = por %p105, %p106
      %p108 = scmp.ne.s32.totalorder %s97, %s100
      %p109 = scmp.eq.s32.totalorder %s22, 1
      %p110 = por %p108, %p109
      %p111 = scmp.ne.s32.totalorder %s100, %s101
      %p112 = scmp.eq.s32.totalorder %s22, 0
      %p113 = por %p111, %p112
      %p114 = scmp.ne.s32.totalorder %s100, %s101
      %p115 = scmp.eq.s32.totalorder %s23, 1
      %p116 = por %p114, %p115
      %p118 = scmp.ne.s32.totalorder %s101, %s117
      %p119 = scmp.eq.s32.totalorder %s23, 0
      %p120 = por %p118, %p119
      %p121 = scmp.le.s32.totalorder 1, %s17
      %p122 = scmp.lt.s32.totalorder %s17, 3
      %p123 = pnand %p121, %p122
      %p124 = pneg %p123
      // Predicated region
      $region9: #{tpu_custom_call.1} parent=5 // pred_check
        _
      $region10: #{tpu_custom_call.1} parent=5 // pred_check_branch
        %126 = sbr.rel (%p123) target = $region12
      $region11: #{tpu_custom_call.1} parent=5 // pred_region
        %s127 = ssub.s32 %s17, 1
      $region12: #{tpu_custom_call.1} parent=5 // pred_fallthru
        _
      %p128 = scmp.lt.s32.totalorder %s17, 2
      // Predicated region
      $region13: #{tpu_custom_call.1} parent=5 // pred_check
        %p129 = pneg %p128
      $region14: #{tpu_custom_call.1} parent=5 // pred_check_branch
        %131 = sbr.rel (%p129) target = $region16
      $region15: #{tpu_custom_call.1} parent=5 // pred_region
        // Predicated region
        $region17: #{tpu_custom_call.1} parent=15 // pred_check
          %p132 = pneg %p51
        $region18: #{tpu_custom_call.1} parent=15 // pred_check_branch
          %134 = sbr.rel (%p132) target = $region20
        $region19: #{tpu_custom_call.1} parent=15 // pred_region
          %s135 = sand.u32 %s41, 1
          %s136 = scalar_lea.sflag [#allocation3], %s135
          %s137 = sand.u32 %s41, 1
          %s138 = smul.addr %s137, 8
          %s139 = scalar_lea.vmem [#allocation2], %s138
          %s140 = smul.u32 2, %s25
          %s142 = ssub.s32 128, 128
          %143 = vsyncadd %s136, %s142
          %s144 = smul.addr %s24, 4
          %s145 = sadd.s32 %s140, %s144
          %s146 = smul.addr %s145, 64
          %s147 = scalar_lea.hbm %s0, %s146
          %s149 = sshll.u32 %s139, 4
          %s150 = int_to_ptr.vmem [resolvable:$true] %s149
          %152 = dma.hbm_to_vmem [thread:$0]  %s147, 128, %s150, %s136
        $region20: #{tpu_custom_call.1} parent=15 // pred_fallthru
          _
        // Predicated region
        $region21: #{tpu_custom_call.1} parent=15 // pred_check
          %p153 = pneg %p79
        $region22: #{tpu_custom_call.1} parent=15 // pred_check_branch
          %155 = sbr.rel (%p153) target = $region24
        $region23: #{tpu_custom_call.1} parent=15 // pred_region
          %s156 = sand.u32 %s69, 1
          %s157 = scalar_lea.sflag [#allocation6], %s156
          %s158 = sand.u32 %s69, 1
          %s159 = smul.addr %s158, 8
          %s160 = scalar_lea.vmem [#allocation5], %s159
          %s161 = smul.u32 2, %s25
          %s163 = ssub.s32 128, 128
          %164 = vsyncadd %s157, %s163
          %s165 = sadd.s32 %s161, 2
          %s166 = smul.addr %s24, 4
          %s167 = sadd.s32 %s165, %s166
          %s168 = smul.addr %s167, 64
          %s169 = scalar_lea.hbm %s1, %s168
          %s171 = sshll.u32 %s160, 4
          %s172 = int_to_ptr.vmem [resolvable:$true] %s171
          %174 = dma.hbm_to_vmem [thread:$0]  %s169, 128, %s172, %s157
        $region24: #{tpu_custom_call.1} parent=15 // pred_fallthru
          _
      $region16: #{tpu_custom_call.1} parent=5 // pred_fallthru
        _
      %p175 = scmp.le.s32.totalorder 1, %s17
      %p176 = scmp.lt.s32.totalorder %s17, 3
      %p177 = pnand %p175, %p176
      %p178 = pneg %p177
      // Predicated region
      $region25: #{tpu_custom_call.1} parent=5 // pred_check
        _
      $region26: #{tpu_custom_call.1} parent=5 // pred_check_branch
        %180 = sbr.rel (%p177) target = $region28
      $region27: #{tpu_custom_call.1} parent=5 // pred_region
        %s181 = ssub.s32 %s17, 1
        %s182 = sand.u32 %s44, 1
        %s183 = scalar_lea.sflag [#allocation3], %s182
        %s184 = sand.u32 %s44, 1
        %s185 = smul.addr %s184, 8
        %s186 = scalar_lea.vmem [#allocation2], %s185
        // Predicated region
        $region29: #{tpu_custom_call.1} parent=27 // pred_check
          %p187 = pneg %p57
        $region30: #{tpu_custom_call.1} parent=27 // pred_check_branch
          %189 = sbr.rel (%p187) target = $region32
        $region31: #{tpu_custom_call.1} parent=27 // pred_region
          %190 = dma.done %s183, 128
        $region32: #{tpu_custom_call.1} parent=27 // pred_fallthru
          _
        %s191 = sand.u32 %s72, 1
        %s192 = scalar_lea.sflag [#allocation6], %s191
        %s193 = sand.u32 %s72, 1
        %s194 = smul.addr %s193, 8
        %s195 = scalar_lea.vmem [#allocation5], %s194
        // Predicated region
        $region33: #{tpu_custom_call.1} parent=27 // pred_check
          %p196 = pneg %p85
        $region34: #{tpu_custom_call.1} parent=27 // pred_check_branch
          %198 = sbr.rel (%p196) target = $region36
        $region35: #{tpu_custom_call.1} parent=27 // pred_region
          %199 = dma.done %s192, 128
        $region36: #{tpu_custom_call.1} parent=27 // pred_fallthru
          _
        %s200 = sand.u32 %s44, 1
        %s201 = scalar_lea.sflag [#allocation3], %s200
        %s202 = sand.u32 %s44, 1
        %s203 = smul.addr %s202, 8
        %s204 = scalar_lea.vmem [#allocation2], %s203
        %p205 = pneg %p57
        %p206 = pneg %p54
        %s207 = sand.u32 %s72, 1
        %s208 = scalar_lea.sflag [#allocation6], %s207
        %s209 = sand.u32 %s72, 1
        %s210 = smul.addr %s209, 8
        %s211 = scalar_lea.vmem [#allocation5], %s210
        %p212 = pneg %p85
        %p213 = pneg %p82
        %p214 = pneg %p113
        %p215 = pneg %p110
        %s216 = sand.u32 %s100, 1
        %s217 = scalar_lea.sflag [#allocation4], %s216
        %s218 = sand.u32 %s100, 1
        %s219 = smul.addr %s218, 8
        %s220 = scalar_lea.vmem [#allocation7], %s219
        %s221 = smul.u32 2, %s27
        %s222 = smul.u32 2, %s27
        %s223 = smul.u32 2, %s27
        %v224 = vld [vmem:[%s186] sm:$0xff]
        %v225 = vld [vmem:[%s195] sm:$0xff]
        %v226 = vmul.f32 %v224, %v225
        %227 = vst [vmem:[%s220] sm:$0xff] %v226
        %s228 = sand.u32 %s100, 1
        %s229 = scalar_lea.sflag [#allocation4], %s228
        %s230 = sand.u32 %s100, 1
        %s231 = smul.addr %s230, 8
        %s232 = scalar_lea.vmem [#allocation7], %s231
        // Predicated region
        $region37: #{tpu_custom_call.1} parent=27 // pred_check
          %p233 = pneg %p110
        $region38: #{tpu_custom_call.1} parent=27 // pred_check_branch
          %235 = sbr.rel (%p233) target = $region40
        $region39: #{tpu_custom_call.1} parent=27 // pred_region
          %s236 = smul.u32 2, %s27
          %s238 = ssub.s32 128, 128
          %239 = vsyncadd %s229, %s238
          %s240 = smul.addr %s26, 2
          %s241 = sadd.s32 %s236, %s240
          %s242 = smul.addr %s241, 64
          %s243 = scalar_lea.hbm %s2, %s242
          %s245 = sshll.u32 %s232, 4
          %s246 = int_to_ptr.vmem [resolvable:$true] %s245
          %248 = dma.vmem_to_hbm [thread:$0]  %s246, 128, %s243, %s229
        $region40: #{tpu_custom_call.1} parent=27 // pred_fallthru
          _
      $region28: #{tpu_custom_call.1} parent=5 // pred_fallthru
        _
      %p249 = scmp.le.s32.totalorder 2, %s17
      // Predicated region
      $region41: #{tpu_custom_call.1} parent=5 // pred_check
        %p250 = pneg %p249
      $region42: #{tpu_custom_call.1} parent=5 // pred_check_branch
        %252 = sbr.rel (%p250) target = $region44
      $region43: #{tpu_custom_call.1} parent=5 // pred_region
        %s253 = ssub.s32 %s17, 2
        // Predicated region
        $region45: #{tpu_custom_call.1} parent=43 // pred_check
          %p254 = pneg %p116
        $region46: #{tpu_custom_call.1} parent=43 // pred_check_branch
          %256 = sbr.rel (%p254) target = $region48
        $region47: #{tpu_custom_call.1} parent=43 // pred_region
          %s257 = sand.u32 %s101, 1
          %s258 = scalar_lea.sflag [#allocation4], %s257
          %s259 = sand.u32 %s101, 1
          %s260 = smul.addr %s259, 8
          %s261 = scalar_lea.vmem [#allocation7], %s260
          %262 = dma.done %s258, 128
        $region48: #{tpu_custom_call.1} parent=43 // pred_fallthru
          _
      $region44: #{tpu_custom_call.1} parent=5 // pred_fallthru
        _
    $region6: #{tpu_custom_call.1} parent=1 // loop_footer
      %s21 = sadd.s32 1, %s17
    $region7: #{tpu_custom_call.1} parent=1 // loop_footer_branch
      %16 = sbr.rel target = $region3
    $region8: #{tpu_custom_call.1} parent=1 // loop_exit
      _
    %263 = vsyncpa [#allocation3], 1
    %s264 = scalar_lea.sflag [#allocation3], 1
    %265 = vsyncpa %s264, 1
    %266 = vsyncpa [#allocation6], 1
    %s267 = scalar_lea.sflag [#allocation6], 1
    %268 = vsyncpa %s267, 1
    %269 = vsyncpa [#allocation4], 1
    %s270 = scalar_lea.sflag [#allocation4], 1
    %271 = vsyncpa %s270, 1

</llo_original>
